<compile_context>
chip_gen: v5e
topology: v5e:2x2
jax: 0.10.0
libtpu: 0.0.40
codegen_flags: <defaults>
</compile_context>

<pallas_src>
import jax
import jax.numpy as jnp
from jax import lax
from jax.experimental import pallas as pl
from jax.experimental.pallas import tpu as pltpu

_LANE = 128
_NCORES = 2      # leading "parallel" grid axis (v7x megacore; no-op on 1-TC chips)


def _round_up(x, m):
    return (x + m - 1) // m * m


def _smooth_sums(full, k, c):
    """full: (rows, c+128) f32.  Returns (rows, c) where
       out[r, i] = sum_{j<k} |full[r, i+j] - mean_{j<k} full[r, i+j]|."""
    l = full.shape[-1]

    def shift(x, m):                 # x[r, i + m]; wrapped tail lanes are unused
        if m == 0:
            return x
        return pltpu.roll(x, shift=l - m, axis=1)

    # Sliding-window sum via shift-doubling: ~2*log2(k) rolls instead of k-1.
    total, tot_len = None, 0
    p, p_len, kk = full, 1, k
    while kk:
        if kk & 1:
            contrib = shift(p, tot_len)
            total = contrib if total is None else total + contrib
            tot_len += p_len
        kk >>= 1
        if kk:
            p = p + shift(p, p_len)
            p_len *= 2
    mean = total[:, :c] * (1.0 / float(k))                   # (rows, c)

    # |x - mean| pass: inherently O(k) rolls (dense VPU/XLU work).
    # TODO(synk): optional MXU banded-matmul variant of the sum pass for k >= 16.
    a = jnp.abs(full[:, :c] - mean)
    for j in range(1, k):
        a = a + jnp.abs(shift(full, j)[:, :c] - mean)
    return a


def _make_kernel(k, w, c, r_tile, tiles_per_core):
    def _fold(acc_ref, d2):          # (r_tile, c) -> accumulate into (8, c)
        s = acc_ref[...]
        for rb in range(r_tile // 8):
            s = s + d2[rb * 8:(rb + 1) * 8, :]
        acc_ref[...] = s

    def kernel(x_ref, o_ref, acc_ref):
        core = pl.program_id(0)
        t = pl.program_id(1)

        @pl.when(t == 0)
        def _init():
            acc_ref[...] = jnp.zeros_like(acc_ref)

        # (2*r_tile, c+128): first r_tile rows = yHat, last r_tile rows = y.
        full = x_ref[...].astype(jnp.float32)
        a = _smooth_sums(full, k, c)
        d = a[:r_tile, :] - a[r_tile:, :]                    # (r_tile, c)

        row0 = (core * tiles_per_core + t) * r_tile          # global signal row
        needs_mask = (row0 + r_tile) * c > w                 # any window idx >= w?

        @pl.when(jnp.logical_not(needs_mask))
        def _acc_full():
            _fold(acc_ref, d * d)

        @pl.when(needs_mask)
        def _acc_masked():
            idx = ((row0 + lax.broadcasted_iota(jnp.int32, (r_tile, c), 0)) * c
                   + lax.broadcasted_iota(jnp.int32, (r_tile, c), 1))
            dm = jnp.where(idx < w, d, 0.0)
            _fold(acc_ref, dm * dm)

        @pl.when(t == pl.num_programs(1) - 1)
        def _finalize():
            o_ref[...] = jnp.sum(acc_ref[...]).reshape(1, 1, 1)

    return kernel


def smoothness_loss(yhat, y, k, *, lane_width=512, rows_per_tile=64):
    """JAX/Pallas equivalent of SmoothnessLoss.forward(yHat, y, k)."""
    assert yhat.ndim == 1 and yhat.shape == y.shape
    n = yhat.shape[0]
    w = n - k - 1                    # matches range(N - k - 1) in the torch code
    assert w >= 1, "need N - k - 1 >= 1 windows"
    assert 1 <= k <= _LANE, "this kernel supports window sizes k <= 128"
    # TODO(synk): support k > 128 by widening the per-row overlap block.

    y = y.astype(yhat.dtype)

    c = min(_round_up(lane_width, _LANE), _round_up(w, _LANE))   # lanes per row
    rows_needed = pl.cdiv(w, c)
    r_tile = min(_round_up(rows_per_tile, 8), _round_up(rows_needed, 8))
    tiles_per_core = pl.cdiv(pl.cdiv(rows_needed, r_tile), _NCORES)
    rows_padded = _NCORES * tiles_per_core * r_tile
    l = c + _LANE
    t_total = rows_padded // r_tile

    # Sublane-dense layout: row r holds signal[r*c : r*c + c + 128]; the extra
    # 128 lanes cover windows spilling into the next row (k <= 128).  Padding
    # only ever feeds windows that are masked out in-kernel.
    flat_len = max((rows_padded + 1) * c, n)

    def widen(x):                    # keeps the input dtype (bf16 stays bf16)
        xp = jnp.pad(x, (0, flat_len - n))
        main = xp[:rows_padded * c].reshape(rows_padded, c)
        nxt = xp[c:c + rows_padded * c].reshape(rows_padded, c)[:, :_LANE]
        return jnp.concatenate([main, nxt], axis=1)          # (rows_padded, l)

    # Block-interleave yHat / y rows so a single (2*r_tile, l) block carries
    # both signals for the same row range -> one DMA per grid step.
    stacked = jnp.stack([widen(yhat).reshape(t_total, r_tile, l),
                         widen(y).reshape(t_total, r_tile, l)], axis=1)
    stacked = stacked.reshape(t_total * 2 * r_tile, l)

    out = pl.pallas_call(
        _make_kernel(k, w, c, r_tile, tiles_per_core),
        out_shape=jax.ShapeDtypeStruct((_NCORES, 1, 1), jnp.float32),
        grid=(_NCORES, tiles_per_core),
        in_specs=[pl.BlockSpec((2 * r_tile, l),
                               lambda core, t: (core * tiles_per_core + t, 0))],
        out_specs=pl.BlockSpec((1, 1, 1), lambda core, t: (core, 0, 0)),
        scratch_shapes=[pltpu.VMEM((8, c), jnp.float32)],
        compiler_params=pltpu.CompilerParams(
            dimension_semantics=("parallel", "arbitrary"),
            vmem_limit_bytes=32 * 1024 * 1024),
    )(stacked)
    return jnp.sum(out) / w


def _reference(yhat, y, k):
    # pure-JAX reference mirroring the PyTorch module exactly
    n = yhat.shape[0]
    w = n - k - 1
    idx = jnp.arange(w)[:, None] + jnp.arange(k)[None, :]

    def smooth(x):
        win = x[idx]
        mean = jnp.mean(win, axis=1, keepdims=True)
        return jnp.sum(jnp.abs(win - mean), axis=1)

    d = smooth(yhat) - smooth(y)
    return jnp.mean(d * d)


if __name__ == "__main__":
    key = jax.random.PRNGKey(0)
    k1, k2 = jax.random.split(key)

    # small case matching the module's forward: 1-D signals, window k
    N, K = 16, 8                           # W = 16 - 8 - 1 = 7 windows
    yhat = jax.random.normal(k1, (N,), dtype=jnp.float32)
    y = jax.random.normal(k2, (N,), dtype=jnp.float32)
    loss = smoothness_loss(yhat, y, K)
    jax.block_until_ready(loss)
    ref = _reference(yhat, y, K)
    assert jnp.allclose(loss, ref, rtol=1e-5, atol=1e-5), (loss, ref)

    # multi-row, masked-tile case (several signal rows inside one tile)
    N2, K2 = 2000, 11                      # W = 1988 -> 4 rows of 512 lanes
    yh2 = jax.random.normal(k1, (N2,), dtype=jnp.float32)
    y2 = jax.random.normal(k2, (N2,), dtype=jnp.float32)
    loss2 = smoothness_loss(yh2, y2, K2)
    jax.block_until_ready(loss2)
    ref2 = _reference(yh2, y2, K2)
    assert jnp.allclose(loss2, ref2, rtol=1e-4, atol=1e-4), (loss2, ref2)

    # exercises fully-valid (unmasked) tiles, multi-tile accumulation per core
    # and both "cores" of the parallel grid axis: W = 69983 -> grid (2, 2)
    N3, K3 = 70000, 16
    yh3 = jax.random.normal(k1, (N3,), dtype=jnp.float32)
    y3 = jax.random.normal(k2, (N3,), dtype=jnp.float32)
    loss3 = smoothness_loss(yh3, y3, K3)
    jax.block_until_ready(loss3)
    ref3 = _reference(yh3, y3, K3)
    assert jnp.allclose(loss3, ref3, rtol=1e-4, atol=1e-4), (loss3, ref3)

    print("KERNEL_OK")
</pallas_src>

<mosaic_0001>
module attributes {stable_mosaic.version = 11 : i64} {
  func.func @kernel(%arg0: i32, %arg1: i32, %arg2: memref<16x256xf32, #tpu.memory_space<vmem>>, %arg3: memref<1x1x1xf32, #tpu.memory_space<vmem>>, %arg4: memref<8x128xf32, #tpu.memory_space<vmem>>) attributes {dimension_semantics = [#tpu.dimension_semantics<parallel>, #tpu.dimension_semantics<arbitrary>], iteration_bounds = array<i64: 2, 1>, scalar_prefetch = 0 : i64, scratch_operands = 1 : i64, tpu.core_type = #tpu.core_type<tc>, window_params = [{transform_indices = @transform_0, window_bounds = array<i64: 16, 256>}, {transform_indices = @transform_1, window_bounds = array<i64: 1, 1, 1>}]} {
    %c0_i32 = arith.constant 0 : i32
    %0 = arith.cmpi eq, %arg1, %c0_i32 : i32
    %1 = arith.extui %0 : i1 to i32
    %c0_i32_0 = arith.constant 0 : i32
    %2 = arith.cmpi ne, %1, %c0_i32_0 : i32
    scf.if %2 {
      %cst_10 = arith.constant 0.000000e+00 : f32
      %68 = vector.broadcast %cst_10 : f32 to vector<8x128xf32>
      %c0_11 = arith.constant 0 : index
      %c0_12 = arith.constant 0 : index
      %69 = vector.load %arg4[%c0_11, %c0_12] : memref<8x128xf32, #tpu.memory_space<vmem>>, vector<8x128xf32>
      tpu.vector_store %arg4[%c0_11, %c0_12], %68 {strides = array<i32>} : memref<8x128xf32, #tpu.memory_space<vmem>>, vector<8x128xf32>,
    } else {
    }
    %c0 = arith.constant 0 : index
    %c0_1 = arith.constant 0 : index
    %3 = vector.load %arg2[%c0, %c0_1] : memref<16x256xf32, #tpu.memory_space<vmem>>, vector<16x256xf32>
    %c255_i32 = arith.constant 255 : i32
    %4 = tpu.dynamic_rotate %3 by %c255_i32 dim 1 : vector<16x256xf32>, i32 -> vector<16x256xf32>
    %5 = arith.addf %3, %4 : vector<16x256xf32>
    %c254_i32 = arith.constant 254 : i32
    %6 = tpu.dynamic_rotate %5 by %c254_i32 dim 1 : vector<16x256xf32>, i32 -> vector<16x256xf32>
    %7 = arith.addf %5, %6 : vector<16x256xf32>
    %c252_i32 = arith.constant 252 : i32
    %8 = tpu.dynamic_rotate %7 by %c252_i32 dim 1 : vector<16x256xf32>, i32 -> vector<16x256xf32>
    %9 = arith.addf %7, %8 : vector<16x256xf32>
    %10 = vector.extract_strided_slice %9 {offsets = [0, 0], sizes = [16, 128], strides = [1, 1]} : vector<16x256xf32> to vector<16x128xf32>
    %cst = arith.constant 1.250000e-01 : f32
    %11 = vector.broadcast %cst : f32 to vector<16x128xf32>
    %12 = arith.mulf %10, %11 : vector<16x128xf32>
    %13 = vector.extract_strided_slice %3 {offsets = [0, 0], sizes = [16, 128], strides = [1, 1]} : vector<16x256xf32> to vector<16x128xf32>
    %14 = arith.subf %13, %12 : vector<16x128xf32>
    %15 = math.absf %14 : vector<16x128xf32>
    %c255_i32_2 = arith.constant 255 : i32
    %16 = tpu.dynamic_rotate %3 by %c255_i32_2 dim 1 : vector<16x256xf32>, i32 -> vector<16x256xf32>
    %17 = vector.extract_strided_slice %16 {offsets = [0, 0], sizes = [16, 128], strides = [1, 1]} : vector<16x256xf32> to vector<16x128xf32>
    %18 = arith.subf %17, %12 : vector<16x128xf32>
    %19 = math.absf %18 : vector<16x128xf32>
    %20 = arith.addf %15, %19 : vector<16x128xf32>
    %c254_i32_3 = arith.constant 254 : i32
    %21 = tpu.dynamic_rotate %3 by %c254_i32_3 dim 1 : vector<16x256xf32>, i32 -> vector<16x256xf32>
    %22 = vector.extract_strided_slice %21 {offsets = [0, 0], sizes = [16, 128], strides = [1, 1]} : vector<16x256xf32> to vector<16x128xf32>
    %23 = arith.subf %22, %12 : vector<16x128xf32>
    %24 = math.absf %23 : vector<16x128xf32>
    %25 = arith.addf %20, %24 : vector<16x128xf32>
    %c253_i32 = arith.constant 253 : i32
    %26 = tpu.dynamic_rotate %3 by %c253_i32 dim 1 : vector<16x256xf32>, i32 -> vector<16x256xf32>
    %27 = vector.extract_strided_slice %26 {offsets = [0, 0], sizes = [16, 128], strides = [1, 1]} : vector<16x256xf32> to vector<16x128xf32>
    %28 = arith.subf %27, %12 : vector<16x128xf32>
    %29 = math.absf %28 : vector<16x128xf32>
    %30 = arith.addf %25, %29 : vector<16x128xf32>
    %c252_i32_4 = arith.constant 252 : i32
    %31 = tpu.dynamic_rotate %3 by %c252_i32_4 dim 1 : vector<16x256xf32>, i32 -> vector<16x256xf32>
    %32 = vector.extract_strided_slice %31 {offsets = [0, 0], sizes = [16, 128], strides = [1, 1]} : vector<16x256xf32> to vector<16x128xf32>
    %33 = arith.subf %32, %12 : vector<16x128xf32>
    %34 = math.absf %33 : vector<16x128xf32>
    %35 = arith.addf %30, %34 : vector<16x128xf32>
    %c251_i32 = arith.constant 251 : i32
    %36 = tpu.dynamic_rotate %3 by %c251_i32 dim 1 : vector<16x256xf32>, i32 -> vector<16x256xf32>
    %37 = vector.extract_strided_slice %36 {offsets = [0, 0], sizes = [16, 128], strides = [1, 1]} : vector<16x256xf32> to vector<16x128xf32>
    %38 = arith.subf %37, %12 : vector<16x128xf32>
    %39 = math.absf %38 : vector<16x128xf32>
    %40 = arith.addf %35, %39 : vector<16x128xf32>
    %c250_i32 = arith.constant 250 : i32
    %41 = tpu.dynamic_rotate %3 by %c250_i32 dim 1 : vector<16x256xf32>, i32 -> vector<16x256xf32>
    %42 = vector.extract_strided_slice %41 {offsets = [0, 0], sizes = [16, 128], strides = [1, 1]} : vector<16x256xf32> to vector<16x128xf32>
    %43 = arith.subf %42, %12 : vector<16x128xf32>
    %44 = math.absf %43 : vector<16x128xf32>
    %45 = arith.addf %40, %44 : vector<16x128xf32>
    %c249_i32 = arith.constant 249 : i32
    %46 = tpu.dynamic_rotate %3 by %c249_i32 dim 1 : vector<16x256xf32>, i32 -> vector<16x256xf32>
    %47 = vector.extract_strided_slice %46 {offsets = [0, 0], sizes = [16, 128], strides = [1, 1]} : vector<16x256xf32> to vector<16x128xf32>
    %48 = arith.subf %47, %12 : vector<16x128xf32>
    %49 = math.absf %48 : vector<16x128xf32>
    %50 = arith.addf %45, %49 : vector<16x128xf32>
    %51 = vector.extract_strided_slice %50 {offsets = [0, 0], sizes = [8, 128], strides = [1, 1]} : vector<16x128xf32> to vector<8x128xf32>
    %52 = vector.extract_strided_slice %50 {offsets = [8, 0], sizes = [8, 128], strides = [1, 1]} : vector<16x128xf32> to vector<8x128xf32>
    %53 = arith.subf %51, %52 : vector<8x128xf32>
    %c1_i32 = arith.constant 1 : i32
    %54 = arith.muli %arg0, %c1_i32 : i32
    %55 = arith.addi %54, %arg1 : i32
    %c8_i32 = arith.constant 8 : i32
    %56 = arith.muli %55, %c8_i32 : i32
    %c8_i32_5 = arith.constant 8 : i32
    %57 = arith.addi %56, %c8_i32_5 : i32
    %c128_i32 = arith.constant 128 : i32
    %58 = arith.muli %57, %c128_i32 : i32
    %c7_i32 = arith.constant 7 : i32
    %59 = arith.cmpi sgt, %58, %c7_i32 : i32
    %true = arith.constant true
    %60 = arith.xori %59, %true : i1
    %61 = arith.extui %60 : i1 to i32
    %c0_i32_6 = arith.constant 0 : i32
    %62 = arith.cmpi ne, %61, %c0_i32_6 : i32
    scf.if %62 {
      %68 = arith.mulf %53, %53 : vector<8x128xf32>
      %c0_10 = arith.constant 0 : index
      %c0_11 = arith.constant 0 : index
      %69 = vector.load %arg4[%c0_10, %c0_11] : memref<8x128xf32, #tpu.memory_space<vmem>>, vector<8x128xf32>
      %70 = arith.addf %69, %68 : vector<8x128xf32>
      %c0_12 = arith.constant 0 : index
      %c0_13 = arith.constant 0 : index
      %71 = vector.load %arg4[%c0_12, %c0_13] : memref<8x128xf32, #tpu.memory_space<vmem>>, vector<8x128xf32>
      tpu.vector_store %arg4[%c0_12, %c0_13], %70 {strides = array<i32>} : memref<8x128xf32, #tpu.memory_space<vmem>>, vector<8x128xf32>,
    } else {
    }
    %63 = arith.extui %59 : i1 to i32
    %c0_i32_7 = arith.constant 0 : i32
    %64 = arith.cmpi ne, %63, %c0_i32_7 : i32
    scf.if %64 {
      %68 = tpu.iota {dimensions = array<i32: 0>} : vector<8x128xi32>
      %69 = vector.broadcast %56 : i32 to vector<8x128xi32>
      %70 = arith.addi %69, %68 : vector<8x128xi32>
      %c128_i32_10 = arith.constant 128 : i32
      %71 = vector.broadcast %c128_i32_10 : i32 to vector<8x128xi32>
      %72 = arith.muli %70, %71 : vector<8x128xi32>
      %73 = tpu.iota {dimensions = array<i32: 1>} : vector<8x128xi32>
      %74 = arith.addi %72, %73 : vector<8x128xi32>
      %c7_i32_11 = arith.constant 7 : i32
      %75 = vector.broadcast %c7_i32_11 : i32 to vector<8x128xi32>
      %76 = arith.cmpi slt, %74, %75 : vector<8x128xi32>
      %cst_12 = arith.constant 0.000000e+00 : f32
      %77 = vector.broadcast %cst_12 : f32 to vector<8x128xf32>
      %78 = arith.select %76, %53, %77 : vector<8x128xi1>, vector<8x128xf32>
      %79 = arith.mulf %78, %78 : vector<8x128xf32>
      %c0_13 = arith.constant 0 : index
      %c0_14 = arith.constant 0 : index
      %80 = vector.load %arg4[%c0_13, %c0_14] : memref<8x128xf32, #tpu.memory_space<vmem>>, vector<8x128xf32>
      %81 = arith.addf %80, %79 : vector<8x128xf32>
      %c0_15 = arith.constant 0 : index
      %c0_16 = arith.constant 0 : index
      %82 = vector.load %arg4[%c0_15, %c0_16] : memref<8x128xf32, #tpu.memory_space<vmem>>, vector<8x128xf32>
      tpu.vector_store %arg4[%c0_15, %c0_16], %81 {strides = array<i32>} : memref<8x128xf32, #tpu.memory_space<vmem>>, vector<8x128xf32>,
    } else {
    }
    %c0_i32_8 = arith.constant 0 : i32
    %65 = arith.cmpi eq, %arg1, %c0_i32_8 : i32
    %66 = arith.extui %65 : i1 to i32
    %c0_i32_9 = arith.constant 0 : i32
    %67 = arith.cmpi ne, %66, %c0_i32_9 : i32
    scf.if %67 {
      %c0_10 = arith.constant 0 : index
      %c0_11 = arith.constant 0 : index
      %68 = vector.load %arg4[%c0_10, %c0_11] : memref<8x128xf32, #tpu.memory_space<vmem>>, vector<8x128xf32>
      %69 = vector.shape_cast %68 : vector<8x128xf32> to vector<1x8x128xf32>
      %cst_12 = arith.constant dense<0.000000e+00> : vector<1xf32>
      %70 = vector.multi_reduction <add>, %69, %cst_12 [1, 2] : vector<1x8x128xf32> to vector<1xf32>
      %71 = vector.shape_cast %70 : vector<1xf32> to vector<1x1x1xf32>
      %72 = vector.extract %71[0, 0, 0] : f32 from vector<1x1x1xf32>
      %73 = vector.broadcast %72 : f32 to vector<1x1x1xf32>
      %c0_13 = arith.constant 0 : index
      %c0_14 = arith.constant 0 : index
      %c0_15 = arith.constant 0 : index
      %74 = vector.load %arg3[%c0_13, %c0_14, %c0_15] : memref<1x1x1xf32, #tpu.memory_space<vmem>>, vector<1x1x1xf32>
      tpu.vector_store %arg3[%c0_13, %c0_14, %c0_15], %73 {strides = array<i32>} : memref<1x1x1xf32, #tpu.memory_space<vmem>>, vector<1x1x1xf32>,
    } else {
    }
    return
  }
  func.func @transform_0(%arg0: i32, %arg1: i32) -> (i32, i32) {
    %c1_i32 = arith.constant 1 : i32
    %0 = arith.muli %arg0, %c1_i32 : i32
    %1 = arith.addi %0, %arg1 : i32
    %c0_i32 = arith.constant 0 : i32
    %c0_i32_0 = arith.constant 0 : i32
    return %1, %c0_i32 : i32, i32
  }
  func.func @transform_1(%arg0: i32, %arg1: i32) -> (i32, i32, i32) {
    %c0_i32 = arith.constant 0 : i32
    %c0_i32_0 = arith.constant 0 : i32
    %c0_i32_1 = arith.constant 0 : i32
    return %arg0, %c0_i32, %c0_i32_0 : i32, i32, i32
  }
}

</mosaic_0001>

<llo_original>
// kernel: tpu_custom_call.1
$region0: #{tpu_custom_call.1}
  #allocation0 [shape = 'u32[]', space=smem, size = 0x4, offset = 0x4, fixed_abs, tag = 'smem constant byte address 0x4 - core index']
  #allocation1 [shape = 'u32[72,128]{1,0:T(1,128)}', space=vmem, size = 0x9000, scoped, tag = 'internal scratch']
  #allocation2 [shape = 'f32[8,128]{1,0:T(8,128)}', space=vmem, size = 0x1000, scoped, tag = 'scratch operand']
  %s0 = inlined_call_operand.hbm [shape: f32[32,256], index: 0, kind: input, shape index: {}]
  %s1 = inlined_call_operand.vmem [shape: f32[2,1,1], index: 1, kind: output, shape index: {}]
  %s2 = sld [smem:[#allocation0]]
  $region57: #{tpu_custom_call.1} parent=0
    _
  %s4 = ssub.s32 1, %s2
  %s5 = scalar_select 0, %s4, %s2
  $region1: #{tpu_custom_call.1} parent=0
    #allocation3 [shape = 'u8[32768]{0}', space=vmem, size = 0x8000, scoped, tag = 'input window, operand 0']
    #allocation4 [shape = 's32[2]{0}', space=sflag, size = 0x8, scoped, tag = 'scoped memory for tpu_custom_call.1']
    %6 = vsyncpa [#allocation4], 0
    %s7 = scalar_lea.sflag [#allocation4], 1
    %8 = vsyncpa %s7, 0
    loop: start=0, step=1, limit=4
    $region2: #{tpu_custom_call.1} parent=1 // loop_pre_header
      _
    $region3: #{tpu_custom_call.1} parent=1 // loop_header
      %s10 = sphi 0, %s14
      %p11 = scmp.ge.s32.totalorder %s10, 4
      %s17 = sphi 0, %s29
      %s18 = sphi 0, %s25
      %s19 = sphi 0, %s17
      %s20 = sphi 0, %s18
      %s21 = sphi 0, %s19
      %s22 = sphi 0, %s20
      %s34 = sphi 0, %s36
      %s37 = sphi 0, %s34
      %s38 = sphi 0, %s37
      %s54 = sphi 0, %s38
      %s60 = sphi 0, %s62
      %s63 = sphi 0, %s60
      %s64 = sphi 0, %s63
      %s80 = sphi 0, %s64
    $region4: #{tpu_custom_call.1} parent=1 // loop_header_branch
      %13 = sbr.rel (%p11) target = $region8
    $region5: #{tpu_custom_call.1} parent=1 // loop_body
      %s15 = ssub.s32 %s10, 1
      %s16 = ssub.s32 %s10, 2
      %s23 = sadd.s32 1, %s18
      %p24 = scmp.ge.s32.totalorder %s23, 1
      %s25 = scalar_select %p24, 0, %s23
      %s26 = sadd.s32 1, %s17
      %s27 = scalar_select %p24, %s26, %s17
      %p28 = scmp.ge.s32.totalorder %s27, 2
      %s29 = scalar_select %p28, 0, %s27
      %s30 = sadd.s32 %s17, %s18
      %s31 = sadd.s32 %s29, %s25
      %s32 = ssub.s32 %s30, %s31
      %p33 = scmp.eq.s32.totalorder %s32, 0
      %s35 = sadd.s32 %s34, 1
      %s36 = scalar_select %p33, %s34, %s35
      %p39 = pneg %p33
      %p40 = scmp.eq.s32.totalorder %s10, 1
      %p41 = por %p39, %p40
      %p42 = scmp.ne.s32.totalorder %s34, %s37
      %p43 = scmp.eq.s32.totalorder %s10, 0
      %p44 = por %p42, %p43
      %p45 = scmp.ne.s32.totalorder %s34, %s37
      %p46 = scmp.eq.s32.totalorder %s15, 1
      %p47 = por %p45, %p46
      %p48 = scmp.ne.s32.totalorder %s37, %s38
      %p49 = scmp.eq.s32.totalorder %s15, 0
      %p50 = por %p48, %p49
      %p51 = scmp.ne.s32.totalorder %s37, %s38
      %p52 = scmp.eq.s32.totalorder %s16, 1
      %p53 = por %p51, %p52
      %p55 = scmp.ne.s32.totalorder %s38, %s54
      %p56 = scmp.eq.s32.totalorder %s16, 0
      %p57 = por %p55, %p56
      %s58 = ssub.s32 %s17, %s29
      %p59 = scmp.eq.s32.totalorder %s58, 0
      %s61 = sadd.s32 %s60, 1
      %s62 = scalar_select %p59, %s60, %s61
      %p65 = pneg %p59
      %p66 = scmp.eq.s32.totalorder %s10, 1
      %p67 = por %p65, %p66
      %p68 = scmp.ne.s32.totalorder %s60, %s63
      %p69 = scmp.eq.s32.totalorder %s10, 0
      %p70 = por %p68, %p69
      %p71 = scmp.ne.s32.totalorder %s60, %s63
      %p72 = scmp.eq.s32.totalorder %s15, 1
      %p73 = por %p71, %p72
      %p74 = scmp.ne.s32.totalorder %s63, %s64
      %p75 = scmp.eq.s32.totalorder %s15, 0
      %p76 = por %p74, %p75
      %p77 = scmp.ne.s32.totalorder %s63, %s64
      %p78 = scmp.eq.s32.totalorder %s16, 1
      %p79 = por %p77, %p78
      %p81 = scmp.ne.s32.totalorder %s64, %s80
      %p82 = scmp.eq.s32.totalorder %s16, 0
      %p83 = por %p81, %p82
      %p84 = scmp.le.s32.totalorder 1, %s10
      %p85 = scmp.lt.s32.totalorder %s10, 3
      %p86 = pnand %p84, %p85
      %p87 = pneg %p86
      // Predicated region
      $region9: #{tpu_custom_call.1} parent=5 // pred_check
        _
      $region10: #{tpu_custom_call.1} parent=5 // pred_check_branch
        %89 = sbr.rel (%p86) target = $region12
      $region11: #{tpu_custom_call.1} parent=5 // pred_region
        %s90 = ssub.s32 %s10, 1
      $region12: #{tpu_custom_call.1} parent=5 // pred_fallthru
        _
      %p91 = scmp.lt.s32.totalorder %s10, 2
      // Predicated region
      $region13: #{tpu_custom_call.1} parent=5 // pred_check
        %p92 = pneg %p91
      $region14: #{tpu_custom_call.1} parent=5 // pred_check_branch
        %94 = sbr.rel (%p92) target = $region16
      $region15: #{tpu_custom_call.1} parent=5 // pred_region
        // Predicated region
        $region17: #{tpu_custom_call.1} parent=15 // pred_check
          %p95 = pneg %p44
        $region18: #{tpu_custom_call.1} parent=15 // pred_check_branch
          %97 = sbr.rel (%p95) target = $region20
        $region19: #{tpu_custom_call.1} parent=15 // pred_region
          %s98 = sand.u32 %s34, 1
          %s99 = scalar_lea.sflag [#allocation4], %s98
          %s100 = sand.u32 %s34, 1
          %s101 = smul.addr %s100, 32
          %s102 = scalar_lea.vmem [#allocation3], %s101
          %s103 = sadd.s32 %s17, %s18
          %s104 = smul.u32 2, %s103
          %106 = vsyncadd %s99, 0
          %s107 = smul.addr %s104, 2
          %s108 = smul.addr %s107, 8
          %s109 = scalar_lea.hbm %s0, %s108
          %s110 = sshll.u32 %s109, 4
          %s111 = int_to_ptr.hbm [resolvable:$true] %s110
          %s112 = sshll.u32 %s102, 4
          %s113 = int_to_ptr.vmem [resolvable:$true] %s112
          %118 = dma.hbm_to_vmem [thread:$0]  %s111, 512, %s113, %s99, 256, 256, 16
        $region20: #{tpu_custom_call.1} parent=15 // pred_fallthru
          _
      $region16: #{tpu_custom_call.1} parent=5 // pred_fallthru
        _
      %p119 = scmp.le.s32.totalorder 1, %s10
      %p120 = scmp.lt.s32.totalorder %s10, 3
      %p121 = pnand %p119, %p120
      %p122 = pneg %p121
      // Predicated region
      $region21: #{tpu_custom_call.1} parent=5 // pred_check
        _
      $region22: #{tpu_custom_call.1} parent=5 // pred_check_branch
        %124 = sbr.rel (%p121) target = $region24
      $region23: #{tpu_custom_call.1} parent=5 // pred_region
        %s125 = ssub.s32 %s10, 1
        %s126 = sand.u32 %s37, 1
        %s127 = scalar_lea.sflag [#allocation4], %s126
        %s128 = sand.u32 %s37, 1
        %s129 = smul.addr %s128, 32
        %s130 = scalar_lea.vmem [#allocation3], %s129
        // Predicated region
        $region25: #{tpu_custom_call.1} parent=23 // pred_check
          %p131 = pneg %p50
        $region26: #{tpu_custom_call.1} parent=23 // pred_check_branch
          %133 = sbr.rel (%p131) target = $region28
        $region27: #{tpu_custom_call.1} parent=23 // pred_region
          %135 = dma.done %s127, 512
        $region28: #{tpu_custom_call.1} parent=23 // pred_fallthru
          _
        %s136 = sand.u32 %s37, 1
        %s137 = scalar_lea.sflag [#allocation4], %s136
        %s138 = sand.u32 %s37, 1
        %s139 = smul.addr %s138, 32
        %s140 = scalar_lea.vmem [#allocation3], %s139
        %p141 = pneg %p50
        %p142 = pneg %p47
        %p143 = pneg %p76
        %p144 = pneg %p73
        %p145 = scmp.lt.s32.totalorder %s19, 1
        %s146 = scalar_select %p145, %s19, 1
        %s147 = scalar_lea.vmem %s1, %s146
        %s148 = sadd.s32 %s19, %s20
        %s149 = smul.u32 2, %s148
        %p150 = scmp.lt.s32.totalorder %s19, 1
        %s151 = scalar_select %p150, %s19, 1
        %s152 = scalar_lea.vmem %s1, %s151
        %p153 = scmp.eq.s32.totalorder %s20, 0
        // Predicated region
        $region29: #{tpu_custom_call.1} parent=23 // pred_check
          %p154 = pneg %p153
        $region30: #{tpu_custom_call.1} parent=23 // pred_check_branch
          %156 = sbr.rel (%p154) target = $region32
        $region31: #{tpu_custom_call.1} parent=23 // pred_region
          %157 = vst [vmem:[#allocation2] sm:$0xff] 0.0
        $region32: #{tpu_custom_call.1} parent=23 // pred_fallthru
          _
        %v158 = vld [vmem:[%s130] sm:$0xff]
        %v159 = vld [vmem:[%s130 + $0x8] sm:$0xff]
        %v160 = vld [vmem:[%s130 + $0x10] sm:$0xff]
        %v161 = vld [vmem:[%s130 + $0x18] sm:$0xff]
        %162 = vrot.lane.b32.xlu0 %v158, 127
        %v163 = vpop.permute.xlu0 %162
        %164 = vrot.lane.b32.xlu0 %v160, 127
        %v165 = vpop.permute.xlu0 %164
        %166 = vrot.lane.b32.xlu0 %v159, 127
        %v167 = vpop.permute.xlu0 %166
        %168 = vrot.lane.b32.xlu0 %v161, 127
        %v169 = vpop.permute.xlu0 %168
        %v170 = vlaneseq
        %v171 = vand.u32 %v170, 127
        %vm172 = vcmp.lt.s32.totalorder %v171, 127
        %v173 = vsel %vm172, %v163, %v167
        %v174 = vsel %vm172, %v165, %v169
        %v175 = vsel %vm172, %v167, %v163
        %v176 = vsel %vm172, %v169, %v165
        %v177 = vadd.f32 %v158, %v173
        %v178 = vadd.f32 %v159, %v175
        %v179 = vadd.f32 %v160, %v174
        %v180 = vadd.f32 %v161, %v176
        %181 = vrot.lane.b32.xlu0 %v177, 126
        %v182 = vpop.permute.xlu0 %181
        %183 = vrot.lane.b32.xlu0 %v179, 126
        %v184 = vpop.permute.xlu0 %183
        %185 = vrot.lane.b32.xlu0 %v178, 126
        %v186 = vpop.permute.xlu0 %185
        %187 = vrot.lane.b32.xlu0 %v180, 126
        %v188 = vpop.permute.xlu0 %187
        %vm189 = vcmp.lt.s32.totalorder %v171, 126
        %v190 = vsel %vm189, %v182, %v186
        %v191 = vsel %vm189, %v184, %v188
        %v192 = vsel %vm189, %v186, %v182
        %v193 = vsel %vm189, %v188, %v184
        %v194 = vadd.f32 %v177, %v190
        %v195 = vadd.f32 %v178, %v192
        %v196 = vadd.f32 %v179, %v191
        %v197 = vadd.f32 %v180, %v193
        %198 = vrot.lane.b32.xlu0 %v194, 124
        %v199 = vpop.permute.xlu0 %198
        %200 = vrot.lane.b32.xlu0 %v196, 124
        %v201 = vpop.permute.xlu0 %200
        %202 = vrot.lane.b32.xlu0 %v195, 124
        %v203 = vpop.permute.xlu0 %202
        %204 = vrot.lane.b32.xlu0 %v197, 124
        %v205 = vpop.permute.xlu0 %204
        %vm206 = vcmp.lt.s32.totalorder %v171, 124
        %v207 = vsel %vm206, %v199, %v203
        %v208 = vsel %vm206, %v201, %v205
        %v209 = vadd.f32 %v194, %v207
        %v210 = vadd.f32 %v196, %v208
        %v211 = vmul.f32 %v209, 0.125
        %v212 = vmul.f32 %v210, 0.125
        %v213 = vsub.f32 %v158, %v211
        %v214 = vsub.f32 %v160, %v212
        %v215 = vand.u32 2147483647, %v213
        %v216 = vand.u32 2147483647, %v214
        %v217 = vsub.f32 %v173, %v211
        %v218 = vsub.f32 %v174, %v212
        %v219 = vand.u32 2147483647, %v217
        %v220 = vand.u32 2147483647, %v218
        %v221 = vadd.f32 %v215, %v219
        %v222 = vadd.f32 %v216, %v220
        %223 = vrot.lane.b32.xlu0 %v158, 126
        %v224 = vpop.permute.xlu0 %223
        %225 = vrot.lane.b32.xlu0 %v160, 126
        %v226 = vpop.permute.xlu0 %225
        %227 = vrot.lane.b32.xlu0 %v159, 126
        %v228 = vpop.permute.xlu0 %227
        %229 = vrot.lane.b32.xlu0 %v161, 126
        %v230 = vpop.permute.xlu0 %229
        %v231 = vsel %vm189, %v224, %v228
        %v232 = vsel %vm189, %v226, %v230
        %v233 = vsub.f32 %v231, %v211
        %v234 = vsub.f32 %v232, %v212
        %v235 = vand.u32 2147483647, %v233
        %v236 = vand.u32 2147483647, %v234
        %v237 = vadd.f32 %v221, %v235
        %v238 = vadd.f32 %v222, %v236
        %239 = vrot.lane.b32.xlu0 %v158, 125
        %v240 = vpop.permute.xlu0 %239
        %241 = vrot.lane.b32.xlu0 %v160, 125
        %v242 = vpop.permute.xlu0 %241
        %243 = vrot.lane.b32.xlu0 %v159, 125
        %v244 = vpop.permute.xlu0 %243
        %245 = vrot.lane.b32.xlu0 %v161, 125
        %v246 = vpop.permute.xlu0 %245
        %vm247 = vcmp.lt.s32.totalorder %v171, 125
        %v248 = vsel %vm247, %v240, %v244
        %v249 = vsel %vm247, %v242, %v246
        %v250 = vsub.f32 %v248, %v211
        %v251 = vsub.f32 %v249, %v212
        %v252 = vand.u32 2147483647, %v250
        %v253 = vand.u32 2147483647, %v251
        %v254 = vadd.f32 %v237, %v252
        %v255 = vadd.f32 %v238, %v253
        %256 = vrot.lane.b32.xlu0 %v158, 124
        %v257 = vpop.permute.xlu0 %256
        %258 = vrot.lane.b32.xlu0 %v160, 124
        %v259 = vpop.permute.xlu0 %258
        %260 = vrot.lane.b32.xlu0 %v159, 124
        %v261 = vpop.permute.xlu0 %260
        %262 = vrot.lane.b32.xlu0 %v161, 124
        %v263 = vpop.permute.xlu0 %262
        %v264 = vsel %vm206, %v257, %v261
        %v265 = vsel %vm206, %v259, %v263
        %v266 = vsub.f32 %v264, %v211
        %v267 = vsub.f32 %v265, %v212
        %v268 = vand.u32 2147483647, %v266
        %v269 = vand.u32 2147483647, %v267
        %v270 = vadd.f32 %v254, %v268
        %v271 = vadd.f32 %v255, %v269
        %272 = vrot.lane.b32.xlu0 %v158, 123
        %v273 = vpop.permute.xlu0 %272
        %274 = vrot.lane.b32.xlu0 %v160, 123
        %v275 = vpop.permute.xlu0 %274
        %276 = vrot.lane.b32.xlu0 %v159, 123
        %v277 = vpop.permute.xlu0 %276
        %278 = vrot.lane.b32.xlu0 %v161, 123
        %v279 = vpop.permute.xlu0 %278
        %vm280 = vcmp.lt.s32.totalorder %v171, 123
        %v281 = vsel %vm280, %v273, %v277
        %v282 = vsel %vm280, %v275, %v279
        %v283 = vsub.f32 %v281, %v211
        %v284 = vsub.f32 %v282, %v212
        %v285 = vand.u32 2147483647, %v283
        %v286 = vand.u32 2147483647, %v284
        %v287 = vadd.f32 %v270, %v285
        %v288 = vadd.f32 %v271, %v286
        %289 = vrot.lane.b32.xlu0 %v158, 122
        %v290 = vpop.permute.xlu0 %289
        %291 = vrot.lane.b32.xlu0 %v160, 122
        %v292 = vpop.permute.xlu0 %291
        %293 = vrot.lane.b32.xlu0 %v159, 122
        %v294 = vpop.permute.xlu0 %293
        %295 = vrot.lane.b32.xlu0 %v161, 122
        %v296 = vpop.permute.xlu0 %295
        %vm297 = vcmp.lt.s32.totalorder %v171, 122
        %v298 = vsel %vm297, %v290, %v294
        %v299 = vsel %vm297, %v292, %v296
        %v300 = vsub.f32 %v298, %v211
        %v301 = vsub.f32 %v299, %v212
        %v302 = vand.u32 2147483647, %v300
        %v303 = vand.u32 2147483647, %v301
        %v304 = vadd.f32 %v287, %v302
        %v305 = vadd.f32 %v288, %v303
        %306 = vrot.lane.b32.xlu0 %v158, 121
        %v307 = vpop.permute.xlu0 %306
        %308 = vrot.lane.b32.xlu0 %v160, 121
        %v309 = vpop.permute.xlu0 %308
        %310 = vrot.lane.b32.xlu0 %v159, 121
        %v311 = vpop.permute.xlu0 %310
        %312 = vrot.lane.b32.xlu0 %v161, 121
        %v313 = vpop.permute.xlu0 %312
        %vm314 = vcmp.lt.s32.totalorder %v171, 121
        %v315 = vsel %vm314, %v307, %v311
        %v316 = vsel %vm314, %v309, %v313
        %v317 = vsub.f32 %v315, %v211
        %v318 = vsub.f32 %v316, %v212
        %v319 = vand.u32 2147483647, %v317
        %v320 = vand.u32 2147483647, %v318
        %v321 = vadd.f32 %v304, %v319
        %v322 = vadd.f32 %v305, %v320
        %v323 = vsub.f32 %v321, %v322
        %s324 = sadd.s32 %s19, %s20
        %s325 = smul.u32 %s324, 8
        %s326 = sadd.s32 %s325, 8
        %s327 = smul.u32 %s326, 128
        %p328 = scmp.gt.s32.totalorder %s327, 7
        %p329 = scmp.le.s32.totalorder %s327, 7
        // Predicated region
        $region33: #{tpu_custom_call.1} parent=23 // pred_check
          %p330 = pneg %p329
        $region34: #{tpu_custom_call.1} parent=23 // pred_check_branch
          %332 = sbr.rel (%p330) target = $region36
        $region35: #{tpu_custom_call.1} parent=23 // pred_region
          %v333 = vmul.f32 %v323, %v323
          %v334 = vld [vmem:[#allocation2] sm:$0xff]
          %v335 = vadd.f32 %v334, %v333
          %336 = vst [vmem:[#allocation2] sm:$0xff] %v335
        $region36: #{tpu_custom_call.1} parent=23 // pred_fallthru
          _
        // Predicated region
        $region37: #{tpu_custom_call.1} parent=23 // pred_check
          %p337 = pneg %p328
        $region38: #{tpu_custom_call.1} parent=23 // pred_check_branch
          %339 = sbr.rel (%p337) target = $region40
        $region39: #{tpu_custom_call.1} parent=23 // pred_region
          %v340 = vlaneseq
          %v341 = vshrl.u32 %v340, 7
          %v342 = vstv %s325
          %v343 = vadd.s32 %v342, %v341
          %v344 = vmul.u32 %v343, 128
          %v345 = vadd.s32 %v344, %v171
          %vm346 = vcmp.lt.s32.totalorder %v345, 7
          %v347 = vsel %vm346, %v323, 0.0
          %v348 = vmul.f32 %v347, %v347
          %v349 = vld [vmem:[#allocation2] sm:$0xff]
          %v350 = vadd.f32 %v349, %v348
          %351 = vst [vmem:[#allocation2] sm:$0xff] %v350
        $region40: #{tpu_custom_call.1} parent=23 // pred_fallthru
          _
        // Predicated region
        $region41: #{tpu_custom_call.1} parent=23 // pred_check
          %p352 = pneg %p153
        $region42: #{tpu_custom_call.1} parent=23 // pred_check_branch
          %354 = sbr.rel (%p352) target = $region44
        $region43: #{tpu_custom_call.1} parent=23 // pred_region
          %v355 = vld [vmem:[#allocation2] sm:$0xff]
          %356 = vadd.xlane.f32.xlu0 %v355
          %v357 = vpop.xlane.xlu0 %356
          %v358 = vrot.slane %v357, 4
          %v359 = vadd.f32 %v357, %v358
          %v360 = vrot.slane %v359, 2
          %v361 = vadd.f32 %v359, %v360
          %v362 = vrot.slane %v361, 1
          %v363 = vadd.f32 %v361, %v362
          %s364 = vtos %v363
          %v365 = vstv %s364
          %vm366 = vcmask 0
          %367 = vst.msk [vmem:[%s152] sm:$0x1] %vm366, %v365
        $region44: #{tpu_custom_call.1} parent=23 // pred_fallthru
          _
        %p368 = scmp.lt.s32.totalorder %s19, 1
        %s369 = scalar_select %p368, %s19, 1
        %s370 = scalar_lea.vmem %s1, %s369
        // Predicated region
        $region45: #{tpu_custom_call.1} parent=23 // pred_check
          %p371 = pneg %p73
        $region46: #{tpu_custom_call.1} parent=23 // pred_check_branch
          %373 = sbr.rel (%p371) target = $region48
        $region47: #{tpu_custom_call.1} parent=23 // pred_region
          _
        $region48: #{tpu_custom_call.1} parent=23 // pred_fallthru
          _
      $region24: #{tpu_custom_call.1} parent=5 // pred_fallthru
        _
      %p374 = scmp.le.s32.totalorder 2, %s10
      // Predicated region
      $region49: #{tpu_custom_call.1} parent=5 // pred_check
        %p375 = pneg %p374
      $region50: #{tpu_custom_call.1} parent=5 // pred_check_branch
        %377 = sbr.rel (%p375) target = $region52
      $region51: #{tpu_custom_call.1} parent=5 // pred_region
        %s378 = ssub.s32 %s10, 2
        // Predicated region
        $region53: #{tpu_custom_call.1} parent=51 // pred_check
          %p379 = pneg %p79
        $region54: #{tpu_custom_call.1} parent=51 // pred_check_branch
          %381 = sbr.rel (%p379) target = $region56
        $region55: #{tpu_custom_call.1} parent=51 // pred_region
          %p382 = scmp.lt.s32.totalorder %s21, 1
          %s383 = scalar_select %p382, %s21, 1
          %s384 = scalar_lea.vmem %s1, %s383
        $region56: #{tpu_custom_call.1} parent=51 // pred_fallthru
          _
      $region52: #{tpu_custom_call.1} parent=5 // pred_fallthru
        _
    $region6: #{tpu_custom_call.1} parent=1 // loop_footer
      %s14 = sadd.s32 1, %s10
    $region7: #{tpu_custom_call.1} parent=1 // loop_footer_branch
      %9 = sbr.rel target = $region3
    $region8: #{tpu_custom_call.1} parent=1 // loop_exit
      _
    %385 = vsyncpa [#allocation4], 1
    %s386 = scalar_lea.sflag [#allocation4], 1
    %387 = vsyncpa %s386, 1

</llo_original>
